<compile_context>
chip_gen: v7x
topology: tpu7x:2x2x1
jax: 0.10.0
libtpu: 0.0.40
codegen_flags: <defaults>
</compile_context>

<pallas_src>
import jax
import jax.numpy as jnp
from jax.experimental import pallas as pl
from jax.experimental.pallas import tpu as pltpu


# ---------------------------------------------------------------------------
# Prologue kernel: compute the single constant output row (runs once, no grid).
# ---------------------------------------------------------------------------
def _const_row_kernel(w1_ref, b1_ref, w2_ref, b2_ref, w3_ref, b3_ref, row_ref):
    # temp = ones_like(x):  ones(1, dim_in) @ W1 == column-sum of W1.
    # (One-shot; accumulation-order difference vs. the MXU matmul is negligible
    #  in f32 at these fan-ins.)
    r = jnp.sum(w1_ref[...].astype(jnp.float32), axis=0, keepdims=True) + b1_ref[...]
    r = jnp.maximum(r, 0.0)
    r = jnp.dot(r, w2_ref[...], preferred_element_type=jnp.float32) + b2_ref[...]
    r = jnp.maximum(r, 0.0)
    r = jnp.dot(r, w3_ref[...], preferred_element_type=jnp.float32) + b3_ref[...]
    row_ref[...] = r.astype(row_ref.dtype)


# ---------------------------------------------------------------------------
# Main kernel: broadcast-store the precomputed lane-dense row into each tile.
# ---------------------------------------------------------------------------
def _broadcast_row_kernel(row_ref, o_ref):
    o_ref[...] = jnp.broadcast_to(row_ref[...], o_ref.shape)


def const_neural_net_forward(x, params, *, tm_rows=None, tile_bytes=4 << 20):
    """ConstNeuralNet forward as Pallas kernels.

    `x` is only consulted for its batch size / dtype (the module discards its
    values); it is never shipped to the kernel.
    """
    (w1, b1), (w2, b2), (w3, b3) = params
    batch = x.shape[0]
    dim_out = w3.shape[1]
    out_dtype = jnp.promote_types(x.dtype, w1.dtype)

    # --- (1) one-shot prologue: the constant (1, dim_out) row --------------
    row = pl.pallas_call(
        _const_row_kernel,
        out_shape=jax.ShapeDtypeStruct((1, dim_out), out_dtype),
    )(w1, b1, w2, b2, w3, b3)

    # --- (2) choose a lane-dense output layout ------------------------------
    # View (batch, dim_out) as (rows, lane) row-major (identical memory layout)
    # so stores use full 128-lane vregs and the writeback DMA is contiguous.
    if dim_out % 128 == 0:
        lane = dim_out                     # already lane-dense
    elif 128 % dim_out == 0:
        lane = 128                         # pack 128/dim_out rows per lane-row
    else:
        lane = dim_out                     # TODO(synk): awkward dim_out keeps masked stores
    rows_per_lane_row = lane // dim_out

    # Pad batch so the lane-dense reshape is exact; slice back at the end.
    padded_batch = ((batch + rows_per_lane_row - 1) // rows_per_lane_row) * rows_per_lane_row
    rows = padded_batch // rows_per_lane_row

    # --- (3) tile sizing: ~tile_bytes per output block -----------------------
    bytes_per_row = lane * jnp.dtype(out_dtype).itemsize
    if tm_rows is None:
        tm_rows = max(8, ((tile_bytes // bytes_per_row) // 8) * 8)
    if tm_rows >= rows:
        tm_rows = rows                     # single full-extent block (always legal)
    else:
        tm_rows = max(8, (tm_rows // 8) * 8)
    rows_padded = ((rows + tm_rows - 1) // tm_rows) * tm_rows
    grid = (rows_padded // tm_rows,)

    # Pre-tile the constant row to the lane width once (tiny XLA op, not per-step).
    row_tiled = jnp.tile(row, (1, rows_per_lane_row))          # (1, lane)

    out2d = pl.pallas_call(
        _broadcast_row_kernel,
        out_shape=jax.ShapeDtypeStruct((rows_padded, lane), out_dtype),
        grid_spec=pltpu.PrefetchScalarGridSpec(
            num_scalar_prefetch=0,
            grid=grid,
            in_specs=[pl.BlockSpec((1, lane), lambda i: (0, 0))],
            out_specs=pl.BlockSpec((tm_rows, lane), lambda i: (i, 0)),
        ),
        compiler_params=pltpu.CompilerParams(
            dimension_semantics=("parallel",)),
    )(row_tiled)

    # Row-major reshape back to (padded_batch, dim_out) is layout-identical (free);
    # slice away any batch padding.
    out = out2d.reshape(rows_padded * rows_per_lane_row, dim_out)
    if out.shape[0] != batch:
        out = out[:batch]
    return out


def init_linear_params(key, fan_in, fan_out):
    """PyTorch-style Linear init: U(-1/sqrt(fan_in), 1/sqrt(fan_in)).

    Weight returned already transposed to (fan_in, fan_out); bias as (1, fan_out).
    """
    kw, kb = jax.random.split(key)
    bound = 1.0 / jnp.sqrt(jnp.float32(fan_in))
    w = jax.random.uniform(kw, (fan_in, fan_out), jnp.float32, -bound, bound)
    b = jax.random.uniform(kb, (1, fan_out), jnp.float32, -bound, bound)
    return w, b


def reference_forward(x, params):
    (w1, b1), (w2, b2), (w3, b3) = params
    t = jnp.ones_like(x)
    h = jnp.maximum(t @ w1 + b1, 0.0)
    h = jnp.maximum(h @ w2 + b2, 0.0)
    return h @ w3 + b3


if __name__ == "__main__":
    # Module hyperparameters (dim_out % dim_in == 0 as asserted in __init__).
    dim_in, dim_hidden, dim_out = 4, [32, 32], 8
    batch = 8

    key = jax.random.PRNGKey(0)
    kx, k1, k2, k3 = jax.random.split(key, 4)

    x = jax.random.normal(kx, (batch, dim_in), jnp.float32)

    dims = [dim_in] + dim_hidden + [dim_out]
    params = [
        init_linear_params(k, fi, fo)
        for k, fi, fo in zip([k1, k2, k3], dims[:-1], dims[1:])
    ]

    # Small batch (single full block, pad-and-slice since 8 < 16 rows/lane-row).
    out = jax.block_until_ready(const_neural_net_forward(x, params))
    ref = reference_forward(x, params)
    assert out.shape == (batch, dim_out)
    assert out.dtype == ref.dtype
    assert jnp.allclose(out, ref, atol=1e-5, rtol=1e-5)

    # Multi-tile gridded, lane-dense path (256 rows of 8 -> 16 lane-rows, tile=8).
    big_batch = 256
    x_big = jax.random.normal(kx, (big_batch, dim_in), jnp.float32)
    out_big = jax.block_until_ready(
        const_neural_net_forward(x_big, params, tm_rows=8))
    ref_big = reference_forward(x_big, params)
    assert out_big.shape == (big_batch, dim_out)
    assert jnp.allclose(out_big, ref_big, atol=1e-5, rtol=1e-5)

    # Ragged batch: pad-and-slice path (250 -> padded 256 -> sliced back).
    rag_batch = 250
    x_rag = jax.random.normal(kx, (rag_batch, dim_in), jnp.float32)
    out_rag = jax.block_until_ready(const_neural_net_forward(x_rag, params))
    ref_rag = reference_forward(x_rag, params)
    assert out_rag.shape == (rag_batch, dim_out)
    assert jnp.allclose(out_rag, ref_rag, atol=1e-5, rtol=1e-5)

    print("KERNEL_OK")
</pallas_src>

<mosaic_0001>
module attributes {stable_mosaic.version = 11 : i64} {
  func.func @_const_row_kernel(%arg0: memref<4x32xf32, #tpu.memory_space<vmem>>, %arg1: memref<1x32xf32, #tpu.memory_space<vmem>>, %arg2: memref<32x32xf32, #tpu.memory_space<vmem>>, %arg3: memref<1x32xf32, #tpu.memory_space<vmem>>, %arg4: memref<32x8xf32, #tpu.memory_space<vmem>>, %arg5: memref<1x8xf32, #tpu.memory_space<vmem>>, %arg6: memref<1x8xf32, #tpu.memory_space<vmem>>) attributes {dimension_semantics = [], scalar_prefetch = 0 : i64, scratch_operands = 0 : i64, tpu.core_type = #tpu.core_type<tc>} {
    %c0 = arith.constant 0 : index
    %c0_0 = arith.constant 0 : index
    %0 = vector.load %arg0[%c0, %c0_0] : memref<4x32xf32, #tpu.memory_space<vmem>>, vector<4x32xf32>
    %cst = arith.constant dense<0.000000e+00> : vector<32xf32>
    %1 = vector.multi_reduction <add>, %0, %cst [0] : vector<4x32xf32> to vector<32xf32>
    %2 = vector.shape_cast %1 : vector<32xf32> to vector<1x32xf32>
    %c0_1 = arith.constant 0 : index
    %c0_2 = arith.constant 0 : index
    %3 = vector.load %arg1[%c0_1, %c0_2] : memref<1x32xf32, #tpu.memory_space<vmem>>, vector<1x32xf32>
    %4 = arith.addf %2, %3 : vector<1x32xf32>
    %cst_3 = arith.constant 0.000000e+00 : f32
    %5 = vector.broadcast %cst_3 : f32 to vector<1x32xf32>
    %6 = arith.maximumf %4, %5 : vector<1x32xf32>
    %c0_4 = arith.constant 0 : index
    %c0_5 = arith.constant 0 : index
    %7 = vector.load %arg2[%c0_4, %c0_5] : memref<32x32xf32, #tpu.memory_space<vmem>>, vector<32x32xf32>
    %cst_6 = arith.constant dense<0.000000e+00> : vector<1x32xf32>
    %8 = tpu.matmul %6, %7, %cst_6 {dimension_numbers = #tpu.dot_dimension_numbers<[1], [0], [0], [1], [0, 0, 1, 1], [], []>} : vector<1x32xf32>, vector<32x32xf32>, vector<1x32xf32> -> vector<1x32xf32>
    %c0_7 = arith.constant 0 : index
    %c0_8 = arith.constant 0 : index
    %9 = vector.load %arg3[%c0_7, %c0_8] : memref<1x32xf32, #tpu.memory_space<vmem>>, vector<1x32xf32>
    %10 = arith.addf %8, %9 : vector<1x32xf32>
    %cst_9 = arith.constant 0.000000e+00 : f32
    %11 = vector.broadcast %cst_9 : f32 to vector<1x32xf32>
    %12 = arith.maximumf %10, %11 : vector<1x32xf32>
    %c0_10 = arith.constant 0 : index
    %c0_11 = arith.constant 0 : index
    %13 = vector.load %arg4[%c0_10, %c0_11] : memref<32x8xf32, #tpu.memory_space<vmem>>, vector<32x8xf32>
    %cst_12 = arith.constant dense<0.000000e+00> : vector<1x8xf32>
    %14 = tpu.matmul %12, %13, %cst_12 {dimension_numbers = #tpu.dot_dimension_numbers<[1], [0], [0], [1], [0, 0, 1, 1], [], []>} : vector<1x32xf32>, vector<32x8xf32>, vector<1x8xf32> -> vector<1x8xf32>
    %c0_13 = arith.constant 0 : index
    %c0_14 = arith.constant 0 : index
    %15 = vector.load %arg5[%c0_13, %c0_14] : memref<1x8xf32, #tpu.memory_space<vmem>>, vector<1x8xf32>
    %16 = arith.addf %14, %15 : vector<1x8xf32>
    %c0_15 = arith.constant 0 : index
    %c0_16 = arith.constant 0 : index
    %17 = vector.load %arg6[%c0_15, %c0_16] : memref<1x8xf32, #tpu.memory_space<vmem>>, vector<1x8xf32>
    tpu.vector_store %arg6[%c0_15, %c0_16], %16 {strides = array<i32>} : memref<1x8xf32, #tpu.memory_space<vmem>>, vector<1x8xf32>,
    return
  }
}

</mosaic_0001>

<llo_original>
// kernel: tpu_custom_call.1
$region0: #{tpu_custom_call.1}
  #allocation0 [shape = 'u32[]', space=smem, size = 0x4, offset = 0x4, fixed_abs, tag = 'smem constant byte address 0x4 - core index']
  #allocation1 [shape = 'u32[144,128]{1,0:T(1,128)}', space=vmem, size = 0x12000, scoped, tag = 'internal scratch']
  %s0 = inlined_call_operand.vmem [shape: f32[4,32], index: 0, kind: input, shape index: {}]
  %s1 = inlined_call_operand.vmem [shape: f32[1,32], index: 1, kind: input, shape index: {}]
  %s2 = inlined_call_operand.vmem [shape: f32[32,32], index: 2, kind: input, shape index: {}]
  %s3 = inlined_call_operand.vmem [shape: f32[1,32], index: 3, kind: input, shape index: {}]
  %s4 = inlined_call_operand.vmem [shape: f32[32,8], index: 4, kind: input, shape index: {}]
  %s5 = inlined_call_operand.vmem [shape: f32[1,8], index: 5, kind: input, shape index: {}]
  %s6 = inlined_call_operand.hbm [shape: f32[1,8], index: 6, kind: output, shape index: {}]
  %s7 = sld [smem:[#allocation0]]
  $region34: #{tpu_custom_call.1} parent=0
    _
  %s9 = ssub.s32 1, %s7
  %s10 = scalar_select 0, %s9, %s7
  $region1: #{tpu_custom_call.1} parent=0
    #allocation2 [shape = 'u8[512]{0}', space=vmem, size = 0x400, scoped, tag = 'output window, operand 0, single buffered']
    #allocation3 [shape = 's32[1]{0}', space=sflag, size = 0x4, scoped, tag = 'scoped memory for tpu_custom_call.1']
    %11 = vsyncpa [#allocation3], 0
    // Predicated region
    $region2: #{tpu_custom_call.1} parent=1 // pred_check
      _
    $region3: #{tpu_custom_call.1} parent=1 // pred_check_branch
      %13 = sbr.rel (0) target = $region5
    $region4: #{tpu_custom_call.1} parent=1 // pred_region
      _
    $region5: #{tpu_custom_call.1} parent=1 // pred_fallthru
      _
    // Predicated region
    $region6: #{tpu_custom_call.1} parent=1 // pred_check
      _
    $region7: #{tpu_custom_call.1} parent=1 // pred_check_branch
      %15 = sbr.rel (0) target = $region9
    $region8: #{tpu_custom_call.1} parent=1 // pred_region
      _
    $region9: #{tpu_custom_call.1} parent=1 // pred_fallthru
      _
    // Predicated region
    $region10: #{tpu_custom_call.1} parent=1 // pred_check
      _
    $region11: #{tpu_custom_call.1} parent=1 // pred_check_branch
      %17 = sbr.rel (0) target = $region13
    $region12: #{tpu_custom_call.1} parent=1 // pred_region
      _
    $region13: #{tpu_custom_call.1} parent=1 // pred_fallthru
      _
    // Predicated region
    $region14: #{tpu_custom_call.1} parent=1 // pred_check
      _
    $region15: #{tpu_custom_call.1} parent=1 // pred_check_branch
      %19 = sbr.rel (0) target = $region17
    $region16: #{tpu_custom_call.1} parent=1 // pred_region
      _
    $region17: #{tpu_custom_call.1} parent=1 // pred_fallthru
      _
    // Predicated region
    $region18: #{tpu_custom_call.1} parent=1 // pred_check
      _
    $region19: #{tpu_custom_call.1} parent=1 // pred_check_branch
      %21 = sbr.rel (0) target = $region21
    $region20: #{tpu_custom_call.1} parent=1 // pred_region
      _
    $region21: #{tpu_custom_call.1} parent=1 // pred_fallthru
      _
    // Predicated region
    $region22: #{tpu_custom_call.1} parent=1 // pred_check
      _
    $region23: #{tpu_custom_call.1} parent=1 // pred_check_branch
      %23 = sbr.rel (0) target = $region25
    $region24: #{tpu_custom_call.1} parent=1 // pred_region
      _
    $region25: #{tpu_custom_call.1} parent=1 // pred_fallthru
      _
    %v24 = vld [vmem:[%s0] sm:$0xf]
    %vm25 = vcmask 257024
    %v26 = vsel %vm25, %v24, 0.0
    %v27 = vrot.slane %v26, 4
    %v28 = vadd.f32 %v26, %v27
    %v29 = vrot.slane %v28, 2
    %v30 = vadd.f32 %v28, %v29
    %v31 = vrot.slane %v30, 1
    %v32 = vadd.f32 %v30, %v31
    %v33 = vld [vmem:[%s1] sm:$0x1]
    %v34 = vadd.f32 %v32, %v33
    %v35 = vmax.f32 %v34, 0.0
    %v36 = vld [vmem:[%s2] sm:$0xff]
    %v37 = vld [vmem:[%s2 + $0x8] sm:$0xff]
    %v38 = vld [vmem:[%s2 + $0x10] sm:$0xff]
    %v39 = vld [vmem:[%s2 + $0x18] sm:$0xff]
    %v40 = vld [vmem:[%s3] sm:$0x1]
    %vm41 = vcmask 261120
    %v43 = vsel %vm41, %v35, 0
    %45 = vmatprep.subr.mxu0 0.0
    %46 = vmatpush1.msra.mxu0 %v36
    %47 = vmatprep.subr.mxu0 0.0
    %48 = vmatpush1.msra.mxu0 %v37
    %49 = vmatprep.subr.mxu0 0.0
    %50 = vmatpush1.msra.mxu0 %v38
    %51 = vmatprep.subr.mxu0 0.0
    %52 = vmatpush1.msra.mxu0 %v39
    %53 = vmatprep.subr.mxu0 0.0
    %54 = vmatpush1.msra.mxu0 0.0
    %55 = vmatprep.subr.mxu0 0.0
    %56 = vmatpush1.msra.mxu0 0.0
    %57 = vmatprep.subr.mxu0 0.0
    %58 = vmatpush1.msra.mxu0 0.0
    %59 = vmatprep.subr.mxu0 0.0
    %60 = vmatpush1.msra.mxu0 0.0
    %61 = vmatprep.subr.mxu0 0.0
    %62 = vmatpush1.msra.mxu0 0.0
    %63 = vmatprep.subr.mxu0 0.0
    %64 = vmatpush1.msra.mxu0 0.0
    %65 = vmatprep.subr.mxu0 0.0
    %66 = vmatpush1.msra.mxu0 0.0
    %67 = vmatprep.subr.mxu0 0.0
    %68 = vmatpush1.msra.mxu0 0.0
    %69 = vmatprep.subr.mxu0 0.0
    %70 = vmatpush1.msra.mxu0 0.0
    %71 = vmatprep.subr.mxu0 0.0
    %72 = vmatpush1.msra.mxu0 0.0
    %73 = vmatprep.subr.mxu0 0.0
    %74 = vmatpush1.msra.mxu0 0.0
    %75 = vmatprep.subr.mxu0 0.0
    %76 = vmatpush1.msra.mxu0 0.0
    %77 = vmatprep.subr.mxu0 0.0
    %78 = vmatpush1.msra.mxu0 0.0
    %79 = vmatprep.subr.mxu0 0.0
    %80 = vmatpush1.msra.mxu0 0.0
    %81 = vmatprep.subr.mxu0 0.0
    %82 = vmatpush1.msra.mxu0 0.0
    %83 = vmatprep.subr.mxu0 0.0
    %84 = vmatpush1.msra.mxu0 0.0
    %85 = vmatprep.subr.mxu0 0.0
    %86 = vmatpush1.msra.mxu0 0.0
    %87 = vmatprep.subr.mxu0 0.0
    %88 = vmatpush1.msra.mxu0 0.0
    %89 = vmatprep.subr.mxu0 0.0
    %90 = vmatpush1.msra.mxu0 0.0
    %91 = vmatprep.subr.mxu0 0.0
    %92 = vmatpush1.msra.mxu0 0.0
    %93 = vmatprep.subr.mxu0 0.0
    %94 = vmatpush1.msra.mxu0 0.0
    %95 = vmatprep.subr.mxu0 0.0
    %96 = vmatpush1.msra.mxu0 0.0
    %97 = vmatprep.subr.mxu0 0.0
    %98 = vmatpush1.msra.mxu0 0.0
    %99 = vmatprep.subr.mxu0 0.0
    %100 = vmatpush1.msra.mxu0 0.0
    %101 = vmatprep.subr.mxu0 0.0
    %102 = vmatpush1.msra.mxu0 0.0
    %103 = vmatprep.subr.mxu0 0.0
    %104 = vmatpush1.msra.mxu0 0.0
    %105 = vmatprep.subr.mxu0 0.0
    %106 = vmatpush1.msra.mxu0 0.0
    %107 = vmatprep.subr.mxu0 0.0
    %108 = vmatpush1.msra.mxu0 0.0
    %109 = vmatprep.mubr.f32.mxu0 0.0
    %110 = vmatmul.mubr.f32.gmra.mrb[0].mxu0 %v43
    %v111 = vpop.f32.mrb[0].mxu0
    %v112 = vadd.f32 %v40, %v111
    %v113 = vpop.f32.mrb[0].mxu0
    %114 = vdwg.mxu0
    %v115 = vmax.f32 %v112, 0.0
    %v116 = vld [vmem:[%s4] sm:$0xff]
    %v117 = vld [vmem:[%s4 + $0x8] sm:$0xff]
    %v118 = vld [vmem:[%s4 + $0x10] sm:$0xff]
    %v119 = vld [vmem:[%s4 + $0x18] sm:$0xff]
    %v120 = vld [vmem:[%s5] sm:$0x1]
    %v122 = vsel %vm41, %v115, 0
    %124 = vmatprep.subr.mxu0 0.0
    %125 = vmatpush1.msra.mxu0 %v116
    %126 = vmatprep.subr.mxu0 0.0
    %127 = vmatpush1.msra.mxu0 %v117
    %128 = vmatprep.subr.mxu0 0.0
    %129 = vmatpush1.msra.mxu0 %v118
    %130 = vmatprep.subr.mxu0 0.0
    %131 = vmatpush1.msra.mxu0 %v119
    %132 = vmatprep.subr.mxu0 0.0
    %133 = vmatpush1.msra.mxu0 0.0
    %134 = vmatprep.subr.mxu0 0.0
    %135 = vmatpush1.msra.mxu0 0.0
    %136 = vmatprep.subr.mxu0 0.0
    %137 = vmatpush1.msra.mxu0 0.0
    %138 = vmatprep.subr.mxu0 0.0
    %139 = vmatpush1.msra.mxu0 0.0
    %140 = vmatprep.subr.mxu0 0.0
    %141 = vmatpush1.msra.mxu0 0.0
    %142 = vmatprep.subr.mxu0 0.0
    %143 = vmatpush1.msra.mxu0 0.0
    %144 = vmatprep.subr.mxu0 0.0
    %145 = vmatpush1.msra.mxu0 0.0
    %146 = vmatprep.subr.mxu0 0.0
    %147 = vmatpush1.msra.mxu0 0.0
    %148 = vmatprep.subr.mxu0 0.0
    %149 = vmatpush1.msra.mxu0 0.0
    %150 = vmatprep.subr.mxu0 0.0
    %151 = vmatpush1.msra.mxu0 0.0
    %152 = vmatprep.subr.mxu0 0.0
    %153 = vmatpush1.msra.mxu0 0.0
    %154 = vmatprep.subr.mxu0 0.0
    %155 = vmatpush1.msra.mxu0 0.0
    %156 = vmatprep.subr.mxu0 0.0
    %157 = vmatpush1.msra.mxu0 0.0
    %158 = vmatprep.subr.mxu0 0.0
    %159 = vmatpush1.msra.mxu0 0.0
    %160 = vmatprep.subr.mxu0 0.0
    %161 = vmatpush1.msra.mxu0 0.0
    %162 = vmatprep.subr.mxu0 0.0
    %163 = vmatpush1.msra.mxu0 0.0
    %164 = vmatprep.subr.mxu0 0.0
    %165 = vmatpush1.msra.mxu0 0.0
    %166 = vmatprep.subr.mxu0 0.0
    %167 = vmatpush1.msra.mxu0 0.0
    %168 = vmatprep.subr.mxu0 0.0
    %169 = vmatpush1.msra.mxu0 0.0
    %170 = vmatprep.subr.mxu0 0.0
    %171 = vmatpush1.msra.mxu0 0.0
    %172 = vmatprep.subr.mxu0 0.0
    %173 = vmatpush1.msra.mxu0 0.0
    %174 = vmatprep.subr.mxu0 0.0
    %175 = vmatpush1.msra.mxu0 0.0
    %176 = vmatprep.subr.mxu0 0.0
    %177 = vmatpush1.msra.mxu0 0.0
    %178 = vmatprep.subr.mxu0 0.0
    %179 = vmatpush1.msra.mxu0 0.0
    %180 = vmatprep.subr.mxu0 0.0
    %181 = vmatpush1.msra.mxu0 0.0
    %182 = vmatprep.subr.mxu0 0.0
    %183 = vmatpush1.msra.mxu0 0.0
    %184 = vmatprep.subr.mxu0 0.0
    %185 = vmatpush1.msra.mxu0 0.0
    %186 = vmatprep.subr.mxu0 0.0
    %187 = vmatpush1.msra.mxu0 0.0
    %188 = vmatprep.mubr.f32.mxu0 0.0
    %189 = vmatmul.mubr.f32.gmra.mrb[0].mxu0 %v122
    %v190 = vpop.f32.mrb[0].mxu0
    %v191 = vadd.f32 %v120, %v190
    %v192 = vpop.f32.mrb[0].mxu0
    %193 = vdwg.mxu0
    %vm194 = vcmask 57344
    %195 = vst.msk [vmem:[#allocation2] sm:$0x1] %vm194, %v191
    // Predicated region
    $region26: #{tpu_custom_call.1} parent=1 // pred_check
      _
    $region27: #{tpu_custom_call.1} parent=1 // pred_check_branch
      %197 = sbr.rel (0) target = $region29
    $region28: #{tpu_custom_call.1} parent=1 // pred_region
      %s199 = ssub.s32 16, 16
      %200 = vsyncadd [#allocation3], %s199
      %s202 = sshll.u32 [#allocation2], 4
      %s203 = int_to_ptr.vmem [resolvable:$true] %s202
      %205 = dma.vmem_to_hbm [thread:$0]  %s203, 16, %s6, [#allocation3]
    $region29: #{tpu_custom_call.1} parent=1 // pred_fallthru
      _
    // Predicated region
    $region30: #{tpu_custom_call.1} parent=1 // pred_check
      _
    $region31: #{tpu_custom_call.1} parent=1 // pred_check_branch
      %207 = sbr.rel (0) target = $region33
    $region32: #{tpu_custom_call.1} parent=1 // pred_region
      %208 = dma.done [#allocation3], 16
    $region33: #{tpu_custom_call.1} parent=1 // pred_fallthru
      _
    %209 = vsyncpa [#allocation3], 1

</llo_original>
